<compile_context>
chip_gen: v5e
topology: v5e:2x2
jax: 0.10.0
libtpu: 0.0.40
codegen_flags: <defaults>
</compile_context>

<pallas_src>
import jax
import jax.numpy as jnp
from jax.experimental import pallas as pl
from jax.experimental.pallas import tpu as pltpu


def _scalar_estimator_kernel(x_ref, w1_ref, b1_ref, w2_ref, b2_ref, o_ref):
    # Layer 1: (TM, D_in) @ (D_in, H) on the MXU, f32 accumulation; bias + ReLU
    # on the VPU.
    h = jnp.dot(x_ref[...], w1_ref[...], preferred_element_type=jnp.float32)
    h = jnp.maximum(h + b1_ref[...], 0.0)                       # (TM, H) f32

    # Layer 2 with the ScalarEstimator reduction pre-folded into a single
    # (H, 1) column: no in-kernel transpose, no cross-lane reduce.
    o_ref[...] = (
        jnp.dot(h, w2_ref[...], preferred_element_type=jnp.float32)
        + b2_ref[...]
    )                                                           # (TM, 1) f32


def _pick_tile_rows(batch, d_in, block_rows):
    """Pick the batch-tile height.

    Big enough (~2 MiB of f32 x per tile) to amortize the fixed per-grid-step
    cost, capped by `block_rows`, never larger than the batch extent, and
    split so the "parallel" grid axis has >= 2 steps (v7x megacore) whenever
    the batch allows it.
    """
    budget_rows = max(128, (2 * 1024 * 1024) // (d_in * 4))   # ~2 MiB f32 tile
    tm = min(block_rows, budget_rows)
    tm = max(128, (tm // 128) * 128)                          # lane/MXU aligned
    if tm >= batch:                                           # never exceed array
        tm = batch if batch < 8 else (batch // 8) * 8
    if tm >= 256 and pl.cdiv(batch, tm) < 2:                  # keep 2 TCs busy (v7x)
        tm = 128 * pl.cdiv(tm // 2, 128)
    return tm


def scalar_estimator_forward(x, w1, b1, w2, b2, *, reduction="mean",
                             block_rows=8192):
    """Fused ScalarEstimator forward.

    Args:
      x:  (B, D_in) f32 preprocessed states (IdentityPreprocessor).
      w1: (D_in, H), b1: (H,)      -- first Linear (x @ W + b layout).
      w2: (H, D_out), b2: (D_out,) -- second Linear; reduced over last axis.
    Returns:
      (B, 1) f32
    """
    B, d_in = x.shape
    d_in_w, H = w1.shape
    d_out = w2.shape[1]
    assert d_in_w == d_in and w2.shape[0] == H and b2.shape[0] == d_out

    # Fold the last-axis reduction into the second layer (exact for linear
    # reductions, up to f32 rounding).  Identity when D_out == 1.
    if d_out == 1:
        w2_col = w2
        b2_eff = b2.reshape(1, 1)
    elif reduction == "mean":
        w2_col = jnp.mean(w2, axis=1, keepdims=True)
        b2_eff = jnp.mean(b2).reshape(1, 1)
    elif reduction == "sum":
        w2_col = jnp.sum(w2, axis=1, keepdims=True)
        b2_eff = jnp.sum(b2).reshape(1, 1)
    else:
        # TODO(synk): 'prod' is nonlinear and cannot be folded into the weights;
        # it would need the full (TM, D_out) activation plus an in-kernel
        # cross-lane product.
        raise NotImplementedError(f"unsupported reduction: {reduction}")

    tm = _pick_tile_rows(B, d_in, block_rows)
    n_tiles = pl.cdiv(B, tm)

    x = x.astype(jnp.float32)
    w1 = w1.astype(jnp.float32)
    b1_row = b1.reshape(1, H).astype(jnp.float32)
    w2_col = w2_col.astype(jnp.float32)
    b2_eff = b2_eff.astype(jnp.float32)

    cost = pl.CostEstimate(
        flops=int(2 * B * H * (d_in + 1)),
        transcendentals=0,
        bytes_accessed=int(4 * (x.size + w1.size + b1_row.size
                                + w2_col.size + b2_eff.size + B)),
    )

    out = pl.pallas_call(
        _scalar_estimator_kernel,
        out_shape=jax.ShapeDtypeStruct((B, 1), jnp.float32),
        grid_spec=pltpu.PrefetchScalarGridSpec(
            num_scalar_prefetch=0,
            grid=(n_tiles,),
            in_specs=[
                pl.BlockSpec((tm, d_in), lambda i: (i, 0)),   # x tiles (pipelined)
                pl.BlockSpec((d_in, H), lambda i: (0, 0)),    # W1, VMEM-resident
                pl.BlockSpec((1, H), lambda i: (0, 0)),       # b1, resident
                pl.BlockSpec((H, 1), lambda i: (0, 0)),       # folded W2 column
                pl.BlockSpec((1, 1), lambda i: (0, 0)),       # folded b2
            ],
            out_specs=pl.BlockSpec((tm, 1), lambda i: (i, 0)),
        ),
        compiler_params=pltpu.CompilerParams(
            dimension_semantics=("parallel",),      # megacore / v7x 2nd TC
            vmem_limit_bytes=32 * 1024 * 1024,      # safe on v5e/v6e/v7x
        ),
        cost_estimate=cost,
    )(x, w1, b1_row, w2_col, b2_eff)

    return out


def reference_forward(x, w1, b1, w2, b2):
    """Pure-JAX (f32) reference mirroring the PyTorch ScalarEstimator."""
    h = jnp.maximum(x @ w1 + b1, 0.0)
    out = h @ w2 + b2
    if out.shape[-1] != 1:
        out = jnp.mean(out, axis=-1, keepdims=True)   # reduction='mean'
    assert out.shape[-1] == 1
    return out


if __name__ == "__main__":
    # Typical ScalarEstimator setup: batch=8 states, input_dim=32, hidden=32,
    # module output_dim=8 (reduced to 1 by the estimator).
    B, D_IN, H, D_OUT = 8, 32, 32, 8

    key = jax.random.PRNGKey(0)
    kx, kw1, kb1, kw2, kb2 = jax.random.split(key, 5)

    x = jax.random.normal(kx, (B, D_IN), dtype=jnp.float32)
    w1 = jax.random.normal(kw1, (D_IN, H), dtype=jnp.float32) / jnp.sqrt(D_IN)
    b1 = jax.random.normal(kb1, (H,), dtype=jnp.float32) * 0.01
    w2 = jax.random.normal(kw2, (H, D_OUT), dtype=jnp.float32) / jnp.sqrt(H)
    b2 = jax.random.normal(kb2, (D_OUT,), dtype=jnp.float32) * 0.01

    out = jax.block_until_ready(scalar_estimator_forward(x, w1, b1, w2, b2))
    ref = reference_forward(x, w1, b1, w2, b2)
    assert out.shape == (B, 1), out.shape
    # Tolerance covers the folded-mean rounding and the MXU's default-precision
    # f32 matmul path.
    assert jnp.allclose(out, ref, atol=2e-2, rtol=2e-2), (out, ref)

    # Multi-tile grid + ragged (partial) trailing tile -- no host-side padding.
    B2 = 260
    x2 = jax.random.normal(jax.random.PRNGKey(1), (B2, D_IN), dtype=jnp.float32)
    out2 = jax.block_until_ready(
        scalar_estimator_forward(x2, w1, b1, w2, b2, block_rows=128))
    ref2 = reference_forward(x2, w1, b1, w2, b2)
    assert out2.shape == (B2, 1), out2.shape
    assert jnp.allclose(out2, ref2, atol=2e-2, rtol=2e-2)

    # Default (large-tile) path: tile clamped to the batch + ragged tail.
    B3 = 300
    x3 = jax.random.normal(jax.random.PRNGKey(2), (B3, D_IN), dtype=jnp.float32)
    out3 = jax.block_until_ready(scalar_estimator_forward(x3, w1, b1, w2, b2))
    ref3 = reference_forward(x3, w1, b1, w2, b2)
    assert out3.shape == (B3, 1), out3.shape
    assert jnp.allclose(out3, ref3, atol=2e-2, rtol=2e-2)

    print("KERNEL_OK")
</pallas_src>

<mosaic_0001>
module attributes {stable_mosaic.version = 11 : i64} {
  func.func @_scalar_estimator_kernel(%arg0: i32, %arg1: memref<8x32xf32, #tpu.memory_space<vmem>>, %arg2: memref<32x32xf32, #tpu.memory_space<vmem>>, %arg3: memref<1x32xf32, #tpu.memory_space<vmem>>, %arg4: memref<32x1xf32, #tpu.memory_space<vmem>>, %arg5: memref<1x1xf32, #tpu.memory_space<vmem>>, %arg6: memref<8x1xf32, #tpu.memory_space<vmem>>) attributes {dimension_semantics = [#tpu.dimension_semantics<parallel>], iteration_bounds = array<i64: 1>, scalar_prefetch = 0 : i64, scratch_operands = 0 : i64, tpu.core_type = #tpu.core_type<tc>, window_params = [{transform_indices = @transform_0, window_bounds = array<i64: 8, 32>}, {pipeline_mode = #tpu.pipeline_mode<synchronous>, transform_indices = @transform_1, window_bounds = array<i64: 32, 32>}, {pipeline_mode = #tpu.pipeline_mode<synchronous>, transform_indices = @transform_2, window_bounds = array<i64: 1, 32>}, {pipeline_mode = #tpu.pipeline_mode<synchronous>, transform_indices = @transform_3, window_bounds = array<i64: 32, 1>}, {pipeline_mode = #tpu.pipeline_mode<synchronous>, transform_indices = @transform_4, window_bounds = array<i64: 1, 1>}, {transform_indices = @transform_5, window_bounds = array<i64: 8, 1>}]} {
    %c0 = arith.constant 0 : index
    %c0_0 = arith.constant 0 : index
    %0 = vector.load %arg1[%c0, %c0_0] : memref<8x32xf32, #tpu.memory_space<vmem>>, vector<8x32xf32>
    %c0_1 = arith.constant 0 : index
    %c0_2 = arith.constant 0 : index
    %1 = vector.load %arg2[%c0_1, %c0_2] : memref<32x32xf32, #tpu.memory_space<vmem>>, vector<32x32xf32>
    %cst = arith.constant dense<0.000000e+00> : vector<8x32xf32>
    %2 = tpu.matmul %0, %1, %cst {dimension_numbers = #tpu.dot_dimension_numbers<[1], [0], [0], [1], [0, 0, 1, 1], [], []>} : vector<8x32xf32>, vector<32x32xf32>, vector<8x32xf32> -> vector<8x32xf32>
    %c0_3 = arith.constant 0 : index
    %c0_4 = arith.constant 0 : index
    %3 = vector.load %arg3[%c0_3, %c0_4] : memref<1x32xf32, #tpu.memory_space<vmem>>, vector<1x32xf32>
    %4 = vector.broadcast %3 : vector<1x32xf32> to vector<8x32xf32>
    %5 = arith.addf %2, %4 : vector<8x32xf32>
    %cst_5 = arith.constant 0.000000e+00 : f32
    %6 = vector.broadcast %cst_5 : f32 to vector<8x32xf32>
    %7 = arith.maximumf %5, %6 : vector<8x32xf32>
    %c0_6 = arith.constant 0 : index
    %c0_7 = arith.constant 0 : index
    %8 = vector.load %arg4[%c0_6, %c0_7] : memref<32x1xf32, #tpu.memory_space<vmem>>, vector<32x1xf32>
    %cst_8 = arith.constant dense<0.000000e+00> : vector<8x1xf32>
    %9 = tpu.matmul %7, %8, %cst_8 {dimension_numbers = #tpu.dot_dimension_numbers<[1], [0], [0], [1], [0, 0, 1, 1], [], []>} : vector<8x32xf32>, vector<32x1xf32>, vector<8x1xf32> -> vector<8x1xf32>
    %c0_9 = arith.constant 0 : index
    %c0_10 = arith.constant 0 : index
    %10 = vector.load %arg5[%c0_9, %c0_10] : memref<1x1xf32, #tpu.memory_space<vmem>>, vector<1x1xf32>
    %11 = vector.broadcast %10 : vector<1x1xf32> to vector<8x1xf32>
    %12 = arith.addf %9, %11 : vector<8x1xf32>
    %c0_11 = arith.constant 0 : index
    %c0_12 = arith.constant 0 : index
    %13 = vector.load %arg6[%c0_11, %c0_12] : memref<8x1xf32, #tpu.memory_space<vmem>>, vector<8x1xf32>
    tpu.vector_store %arg6[%c0_11, %c0_12], %12 {strides = array<i32>} : memref<8x1xf32, #tpu.memory_space<vmem>>, vector<8x1xf32>,
    return
  }
  func.func @transform_0(%arg0: i32) -> (i32, i32) {
    %c0_i32 = arith.constant 0 : i32
    %c0_i32_0 = arith.constant 0 : i32
    return %arg0, %c0_i32 : i32, i32
  }
  func.func @transform_1(%arg0: i32) -> (i32, i32) {
    %c0_i32 = arith.constant 0 : i32
    %c0_i32_0 = arith.constant 0 : i32
    %c0_i32_1 = arith.constant 0 : i32
    return %c0_i32, %c0_i32_0 : i32, i32
  }
  func.func @transform_2(%arg0: i32) -> (i32, i32) {
    %c0_i32 = arith.constant 0 : i32
    %c0_i32_0 = arith.constant 0 : i32
    %c0_i32_1 = arith.constant 0 : i32
    return %c0_i32, %c0_i32_0 : i32, i32
  }
  func.func @transform_3(%arg0: i32) -> (i32, i32) {
    %c0_i32 = arith.constant 0 : i32
    %c0_i32_0 = arith.constant 0 : i32
    %c0_i32_1 = arith.constant 0 : i32
    return %c0_i32, %c0_i32_0 : i32, i32
  }
  func.func @transform_4(%arg0: i32) -> (i32, i32) {
    %c0_i32 = arith.constant 0 : i32
    %c0_i32_0 = arith.constant 0 : i32
    %c0_i32_1 = arith.constant 0 : i32
    return %c0_i32, %c0_i32_0 : i32, i32
  }
  func.func @transform_5(%arg0: i32) -> (i32, i32) {
    %c0_i32 = arith.constant 0 : i32
    %c0_i32_0 = arith.constant 0 : i32
    return %arg0, %c0_i32 : i32, i32
  }
}

</mosaic_0001>

<llo_original>
// kernel: tpu_custom_call.1
$region0: #{tpu_custom_call.1}
  #allocation0 [shape = 'u32[]', space=smem, size = 0x4, offset = 0x4, fixed_abs, tag = 'smem constant byte address 0x4 - core index']
  #allocation1 [shape = 'u32[72,128]{1,0:T(1,128)}', space=vmem, size = 0x9000, scoped, tag = 'internal scratch']
  #allocation2 [shape = 'f32[1,1]{1,0:T(1,128)S(1)}', space=vmem, size = 0x200, scoped, tag = 'scoped memory for tpu_custom_call.1']
  %s0 = inlined_call_operand.hbm [shape: f32[8,32], index: 0, kind: input, shape index: {}]
  %s1 = inlined_call_operand.vmem [shape: f32[32,32], index: 1, kind: input, shape index: {}]
  %s2 = inlined_call_operand.vmem [shape: f32[1,32], index: 2, kind: input, shape index: {}]
  %s3 = inlined_call_operand.vmem [shape: f32[32,1], index: 3, kind: input, shape index: {}]
  %s4 = inlined_call_operand.<no memory space> [shape: f32[1,1], index: 4, kind: input, shape index: {}]
  %s5 = inlined_call_operand.vmem [shape: f32[8,1], index: 5, kind: output, shape index: {}]
  %s6 = sld [smem:[#allocation0]]
  $region34: #{tpu_custom_call.1} parent=0
    _
  %s8 = ssub.s32 1, %s6
  %s9 = scalar_select 0, %s8, %s6
  %v10 = vstv %s4
  %11 = vst [vmem:[#allocation2] sm:$0x1] %v10
  $region1: #{tpu_custom_call.1} parent=0
    #allocation3 [shape = 'u8[4096]{0}', space=vmem, size = 0x1000, scoped, tag = 'input window, operand 0, single buffered']
    #allocation4 [shape = 's32[1]{0}', space=sflag, size = 0x4, scoped, tag = 'scoped memory for tpu_custom_call.1']
    %12 = vsyncpa [#allocation4], 0
    // Predicated region
    $region2: #{tpu_custom_call.1} parent=1 // pred_check
      _
    $region3: #{tpu_custom_call.1} parent=1 // pred_check_branch
      %14 = sbr.rel (0) target = $region5
    $region4: #{tpu_custom_call.1} parent=1 // pred_region
      %16 = vsyncadd [#allocation4], 0
      %s18 = sshll.u32 %s0, 4
      %s19 = int_to_ptr.hbm [resolvable:$true] %s18
      %s20 = sshll.u32 [#allocation3], 4
      %s21 = int_to_ptr.vmem [resolvable:$true] %s20
      %23 = dma.hbm_to_vmem [thread:$0]  %s19, 128, %s21, [#allocation4]
    $region5: #{tpu_custom_call.1} parent=1 // pred_fallthru
      _
    // Predicated region
    $region6: #{tpu_custom_call.1} parent=1 // pred_check
      _
    $region7: #{tpu_custom_call.1} parent=1 // pred_check_branch
      %25 = sbr.rel (0) target = $region9
    $region8: #{tpu_custom_call.1} parent=1 // pred_region
      _
    $region9: #{tpu_custom_call.1} parent=1 // pred_fallthru
      _
    // Predicated region
    $region10: #{tpu_custom_call.1} parent=1 // pred_check
      _
    $region11: #{tpu_custom_call.1} parent=1 // pred_check_branch
      %27 = sbr.rel (0) target = $region13
    $region12: #{tpu_custom_call.1} parent=1 // pred_region
      _
    $region13: #{tpu_custom_call.1} parent=1 // pred_fallthru
      _
    // Predicated region
    $region14: #{tpu_custom_call.1} parent=1 // pred_check
      _
    $region15: #{tpu_custom_call.1} parent=1 // pred_check_branch
      %29 = sbr.rel (0) target = $region17
    $region16: #{tpu_custom_call.1} parent=1 // pred_region
      _
    $region17: #{tpu_custom_call.1} parent=1 // pred_fallthru
      _
    // Predicated region
    $region18: #{tpu_custom_call.1} parent=1 // pred_check
      _
    $region19: #{tpu_custom_call.1} parent=1 // pred_check_branch
      %31 = sbr.rel (0) target = $region21
    $region20: #{tpu_custom_call.1} parent=1 // pred_region
      _
    $region21: #{tpu_custom_call.1} parent=1 // pred_fallthru
      _
    // Predicated region
    $region22: #{tpu_custom_call.1} parent=1 // pred_check
      _
    $region23: #{tpu_custom_call.1} parent=1 // pred_check_branch
      %33 = sbr.rel (0) target = $region25
    $region24: #{tpu_custom_call.1} parent=1 // pred_region
      %35 = dma.done [#allocation4], 128
    $region25: #{tpu_custom_call.1} parent=1 // pred_fallthru
      _
    %v36 = vld [vmem:[#allocation3] sm:$0xff]
    %v37 = vld [vmem:[%s1] sm:$0xff]
    %v38 = vld [vmem:[%s1 + $0x8] sm:$0xff]
    %v39 = vld [vmem:[%s1 + $0x10] sm:$0xff]
    %v40 = vld [vmem:[%s1 + $0x18] sm:$0xff]
    %v41 = vld [vmem:[%s2] sm:$0x1]
    %v43 = vperm.slane %v41, 0
    %vm45 = vcmask 261120
    %v47 = vsel %vm45, %v36, 0
    %49 = vmatpush.msra.mxu0 0.0
    %50 = vmatpush.msra.mxu0 0.0
    %51 = vmatpush.msra.mxu0 0.0
    %52 = vmatpush.msra.mxu0 0.0
    %53 = vmatpush.msra.mxu0 0.0
    %54 = vmatpush.msra.mxu0 0.0
    %55 = vmatpush.msra.mxu0 0.0
    %56 = vmatpush.msra.mxu0 0.0
    %57 = vmatpush.msra.mxu0 0.0
    %58 = vmatpush.msra.mxu0 0.0
    %59 = vmatpush.msra.mxu0 0.0
    %60 = vmatpush.msra.mxu0 0.0
    %61 = vmatpush.msra.mxu0 %v40
    %62 = vmatpush.msra.mxu0 %v39
    %63 = vmatpush.msra.mxu0 %v38
    %64 = vmatpush.msra.mxu0 %v37
    %65 = vmatmul.f32.gmra.mxu0 %v47
    %v66 = vpop.f32.mrf.mxu0
    %v67 = vadd.f32 %v43, %v66
    %68 = vdwg.mxu0
    %v69 = vmax.f32 %v67, 0.0
    %v70 = vld [vmem:[%s3] sm:$0xff]
    %v71 = vld [vmem:[%s3 + $0x8] sm:$0xff]
    %v72 = vld [vmem:[%s3 + $0x10] sm:$0xff]
    %v73 = vld [vmem:[%s3 + $0x18] sm:$0xff]
    %v74 = vld [vmem:[#allocation2] sm:$0x1]
    %v76 = vperm.slane %v74, 0
    %v79 = vsel %vm45, %v69, 0
    %81 = vmatpush.msra.mxu0 0.0
    %82 = vmatpush.msra.mxu0 0.0
    %83 = vmatpush.msra.mxu0 0.0
    %84 = vmatpush.msra.mxu0 0.0
    %85 = vmatpush.msra.mxu0 0.0
    %86 = vmatpush.msra.mxu0 0.0
    %87 = vmatpush.msra.mxu0 0.0
    %88 = vmatpush.msra.mxu0 0.0
    %89 = vmatpush.msra.mxu0 0.0
    %90 = vmatpush.msra.mxu0 0.0
    %91 = vmatpush.msra.mxu0 0.0
    %92 = vmatpush.msra.mxu0 0.0
    %93 = vmatpush.msra.mxu0 %v73
    %94 = vmatpush.msra.mxu0 %v72
    %95 = vmatpush.msra.mxu0 %v71
    %96 = vmatpush.msra.mxu0 %v70
    %97 = vmatmul.f32.gmra.mxu0 %v79
    %v98 = vpop.f32.mrf.mxu0
    %v99 = vadd.f32 %v76, %v98
    %100 = vdwg.mxu0
    %vm101 = vcmask 7168
    %102 = vst.msk [vmem:[%s5] sm:$0xff] %vm101, %v99
    // Predicated region
    $region26: #{tpu_custom_call.1} parent=1 // pred_check
      _
    $region27: #{tpu_custom_call.1} parent=1 // pred_check_branch
      %104 = sbr.rel (0) target = $region29
    $region28: #{tpu_custom_call.1} parent=1 // pred_region
      _
    $region29: #{tpu_custom_call.1} parent=1 // pred_fallthru
      _
    // Predicated region
    $region30: #{tpu_custom_call.1} parent=1 // pred_check
      _
    $region31: #{tpu_custom_call.1} parent=1 // pred_check_branch
      %106 = sbr.rel (0) target = $region33
    $region32: #{tpu_custom_call.1} parent=1 // pred_region
      _
    $region33: #{tpu_custom_call.1} parent=1 // pred_fallthru
      _
    %107 = vsyncpa [#allocation4], 1

</llo_original>
